<compile_context>
chip_gen: v7x
topology: tpu7x:2x2x1
jax: 0.10.0
libtpu: 0.0.40
codegen_flags: <defaults>
</compile_context>

<pallas_src>
import math
import functools

import jax
import jax.numpy as jnp
from jax.experimental import pallas as pl
from jax.experimental.pallas import tpu as pltpu

_LANE = 128


def _round_up(v, m):
    return ((v + m - 1) // m) * m


def _sublane_min(dtype):
    # 8 sublanes for f32, 16 for bf16, 32 for int8/fp8.
    return max(8, 32 // jnp.dtype(dtype).itemsize)


def _pick_tile(padded_dim, unit, cap):
    """Largest multiple of `unit` that divides `padded_dim` and is <= cap."""
    if padded_dim <= cap:
        return padded_dim
    best = unit
    t = unit
    while t <= cap:
        if padded_dim % t == 0:
            best = t
        t += unit
    return best


def _linear_kernel(x_ref, w_ref, b_ref, o_ref, acc_ref):
    # x_ref: (tm, tk) bf16   w_ref: (tk, tn) bf16   b_ref: (1, tn) f32
    # o_ref: (tm, tn) out dtype   acc_ref: (tm, tn) f32, resident across k.
    k = pl.program_id(2)

    @pl.when(k == 0)
    def _():
        # Seed the accumulator with the broadcast bias: removes the separate
        # full-tile add from the epilogue.
        acc_ref[...] = jnp.broadcast_to(b_ref[...], acc_ref.shape).astype(
            jnp.float32
        )

    acc_ref[...] += jnp.dot(
        x_ref[...], w_ref[...], preferred_element_type=jnp.float32
    )

    @pl.when(k == pl.num_programs(2) - 1)
    def _():
        o_ref[...] = acc_ref[...].astype(o_ref.dtype)


@functools.partial(jax.jit, static_argnames=("tm", "tn", "tk"))
def linear_forward(x, w_kn, bias, *, tm=None, tn=None, tk=None):
    """Linear forward: x @ W^T + b.

    x:    (M, K) activations (any float dtype; output keeps this dtype).
    w_kn: (Kp, Np) weight — ALREADY transposed to (K, N), cast to bf16 and
          zero-padded to multiples of 128 at init time.
    bias: (N,) f32 bias (unpadded; padding a 1-D bias per call is free).
    """
    out_dtype = x.dtype
    M, K = x.shape
    Kp, Np = w_kn.shape
    N = bias.shape[0]
    assert K <= Kp and N <= Np, ((K, N), (Kp, Np))

    compute_dtype = w_kn.dtype  # bf16
    sub = _sublane_min(compute_dtype)
    Mp = _round_up(M, sub)

    # Tile selection: divisors of the (lightly) padded dims, lane/sublane
    # aligned, capped so the double-buffered footprint stays well inside VMEM
    # on every generation (v7x: 64 MiB physical).
    if tm is None:
        tm = Mp if Mp <= 512 else _pick_tile(Mp, sub, 512)
    if tn is None:
        tn = _pick_tile(Np, _LANE, 1024)
    if tk is None:
        tk = _pick_tile(Kp, _LANE, 2048)

    # Per-call (cheap) activation + bias padding; weight was padded at init.
    xp = x.astype(compute_dtype)
    if (Mp, Kp) != (M, K):
        xp = jnp.pad(xp, ((0, Mp - M), (0, Kp - K)))
    b2d = bias.astype(jnp.float32).reshape(1, N)
    if Np != N:
        b2d = jnp.pad(b2d, ((0, 0), (0, Np - N)))

    grid = (Mp // tm, Np // tn, Kp // tk)  # reduction axis (K) last

    # VMEM budget: 2 bufs per input + 2 bufs for output + f32 accumulator,
    # with ~1.5x headroom for compiler scratch, clamped to [32, 48] MiB so it
    # is legal on v5e/v6e (128 MiB physical) and safe on v7x (64 MiB).
    bytes_c = jnp.dtype(compute_dtype).itemsize
    bytes_o = jnp.dtype(out_dtype).itemsize
    footprint = (
        2 * tm * tk * bytes_c
        + 2 * tk * tn * bytes_c
        + 2 * tm * tn * bytes_o
        + tm * tn * 4
        + 2 * tn * 4
    )
    vmem_limit = int(min(48 << 20, max(32 << 20, int(footprint * 1.5))))

    out = pl.pallas_call(
        _linear_kernel,
        out_shape=jax.ShapeDtypeStruct((Mp, Np), out_dtype),
        grid=grid,
        in_specs=[
            pl.BlockSpec((tm, tk), lambda i, j, k: (i, k)),  # activations
            pl.BlockSpec((tk, tn), lambda i, j, k: (k, j)),  # weight
            pl.BlockSpec((1, tn), lambda i, j, k: (0, j)),   # bias
        ],
        out_specs=pl.BlockSpec((tm, tn), lambda i, j, k: (i, j)),
        scratch_shapes=[pltpu.VMEM((tm, tn), jnp.float32)],
        compiler_params=pltpu.CompilerParams(
            dimension_semantics=("parallel", "parallel", "arbitrary"),
            vmem_limit_bytes=vmem_limit,
        ),
    )(xp, w_kn, b2d)

    if (Mp, Np) != (M, N):
        out = out[:M, :N]
    return out


def init_linear_params(key, n_input, n_output):
    """Matches the PyTorch module's init, stored in kernel-friendly layout.

    weight: xavier_uniform_ over (n_output, n_input), stored as (K, N) in
            bf16, zero-padded ONCE to multiples of 128 in both dims.
    bias:   U(-1/sqrt(n_input), 1/sqrt(n_input)) (nn.Linear default), f32.
    """
    k_w, k_b = jax.random.split(key)
    w_bound = math.sqrt(6.0 / (n_input + n_output))
    weight_nk = jax.random.uniform(
        k_w, (n_output, n_input), jnp.float32, minval=-w_bound, maxval=w_bound
    )
    w_kn = weight_nk.T.astype(jnp.bfloat16)  # one-time layout + dtype change
    Kp, Np = _round_up(n_input, _LANE), _round_up(n_output, _LANE)
    if (Kp, Np) != (n_input, n_output):
        w_kn = jnp.pad(w_kn, ((0, Kp - n_input), (0, Np - n_output)))
    b_bound = 1.0 / math.sqrt(n_input)
    bias = jax.random.uniform(
        k_b, (n_output,), jnp.float32, minval=-b_bound, maxval=b_bound
    )
    return w_kn, bias


if __name__ == "__main__":
    key = jax.random.PRNGKey(0)
    k_x, k_p, k2_x, k2_p = jax.random.split(key, 4)

    # --- small demo shape consistent with the module ---
    batch, n_input, n_output = 8, 32, 16
    x = jax.random.normal(k_x, (batch, n_input), dtype=jnp.float32)
    w_kn, bias = init_linear_params(k_p, n_input, n_output)

    out = linear_forward(x, w_kn, bias)
    jax.block_until_ready(out)

    # Reference with identical bf16 inputs but f32 accumulation (tolerance is
    # loose only for accumulation-order differences).
    w_f32 = w_kn[:n_input, :n_output].astype(jnp.float32)
    ref = x.astype(jnp.bfloat16).astype(jnp.float32) @ w_f32 + bias
    assert out.shape == (batch, n_output)
    assert jnp.allclose(out, ref, atol=1e-3, rtol=1e-3)

    # --- second check: non-128-divisible shape to exercise padding/tiling ---
    M2, K2, N2 = 200, 300, 260
    x2 = jax.random.normal(k2_x, (M2, K2), dtype=jnp.float32)
    w2_kn, bias2 = init_linear_params(k2_p, K2, N2)

    out2 = linear_forward(x2, w2_kn, bias2)
    jax.block_until_ready(out2)

    w2_f32 = w2_kn[:K2, :N2].astype(jnp.float32)
    ref2 = x2.astype(jnp.bfloat16).astype(jnp.float32) @ w2_f32 + bias2
    assert out2.shape == (M2, N2)
    assert jnp.allclose(out2, ref2, atol=1e-2, rtol=1e-2)

    print("KERNEL_OK")
</pallas_src>

<mosaic_0001>
module attributes {stable_mosaic.version = 11 : i64} {
  func.func @_linear_kernel(%arg0: i32, %arg1: i32, %arg2: i32, %arg3: memref<16x128xbf16, #tpu.memory_space<vmem>>, %arg4: memref<128x128xbf16, #tpu.memory_space<vmem>>, %arg5: memref<1x128xf32, #tpu.memory_space<vmem>>, %arg6: memref<16x128xf32, #tpu.memory_space<vmem>>, %arg7: memref<16x128xf32, #tpu.memory_space<vmem>>) attributes {dimension_semantics = [#tpu.dimension_semantics<parallel>, #tpu.dimension_semantics<parallel>, #tpu.dimension_semantics<arbitrary>], iteration_bounds = array<i64: 1, 1, 1>, scalar_prefetch = 0 : i64, scratch_operands = 1 : i64, tpu.core_type = #tpu.core_type<tc>, window_params = [{transform_indices = @transform_0, window_bounds = array<i64: 16, 128>}, {transform_indices = @transform_1, window_bounds = array<i64: 128, 128>}, {transform_indices = @transform_2, window_bounds = array<i64: 1, 128>}, {transform_indices = @transform_3, window_bounds = array<i64: 16, 128>}]} {
    %c0_i32 = arith.constant 0 : i32
    %0 = arith.cmpi eq, %arg2, %c0_i32 : i32
    %1 = arith.extui %0 : i1 to i32
    %c0_i32_0 = arith.constant 0 : i32
    %2 = arith.cmpi ne, %1, %c0_i32_0 : i32
    scf.if %2 {
      %c0_10 = arith.constant 0 : index
      %c0_11 = arith.constant 0 : index
      %12 = vector.load %arg5[%c0_10, %c0_11] : memref<1x128xf32, #tpu.memory_space<vmem>>, vector<1x128xf32>
      %13 = vector.shape_cast %12 : vector<1x128xf32> to vector<1x128xf32>
      %14 = vector.broadcast %13 : vector<1x128xf32> to vector<16x128xf32>
      %c0_12 = arith.constant 0 : index
      %c0_13 = arith.constant 0 : index
      %15 = vector.load %arg7[%c0_12, %c0_13] : memref<16x128xf32, #tpu.memory_space<vmem>>, vector<16x128xf32>
      tpu.vector_store %arg7[%c0_12, %c0_13], %14 {strides = array<i32>} : memref<16x128xf32, #tpu.memory_space<vmem>>, vector<16x128xf32>,
    } else {
    }
    %c0 = arith.constant 0 : index
    %c0_1 = arith.constant 0 : index
    %3 = vector.load %arg7[%c0, %c0_1] : memref<16x128xf32, #tpu.memory_space<vmem>>, vector<16x128xf32>
    %c0_2 = arith.constant 0 : index
    %c0_3 = arith.constant 0 : index
    %4 = vector.load %arg3[%c0_2, %c0_3] : memref<16x128xbf16, #tpu.memory_space<vmem>>, vector<16x128xbf16>
    %c0_4 = arith.constant 0 : index
    %c0_5 = arith.constant 0 : index
    %5 = vector.load %arg4[%c0_4, %c0_5] : memref<128x128xbf16, #tpu.memory_space<vmem>>, vector<128x128xbf16>
    %cst = arith.constant dense<0.000000e+00> : vector<16x128xf32>
    %6 = tpu.matmul %4, %5, %cst {dimension_numbers = #tpu.dot_dimension_numbers<[1], [0], [0], [1], [0, 0, 1, 1], [], []>} : vector<16x128xbf16>, vector<128x128xbf16>, vector<16x128xf32> -> vector<16x128xf32>
    %7 = arith.addf %3, %6 : vector<16x128xf32>
    %c0_6 = arith.constant 0 : index
    %c0_7 = arith.constant 0 : index
    %8 = vector.load %arg7[%c0_6, %c0_7] : memref<16x128xf32, #tpu.memory_space<vmem>>, vector<16x128xf32>
    tpu.vector_store %arg7[%c0_6, %c0_7], %7 {strides = array<i32>} : memref<16x128xf32, #tpu.memory_space<vmem>>, vector<16x128xf32>,
    %c0_i32_8 = arith.constant 0 : i32
    %9 = arith.cmpi eq, %arg2, %c0_i32_8 : i32
    %10 = arith.extui %9 : i1 to i32
    %c0_i32_9 = arith.constant 0 : i32
    %11 = arith.cmpi ne, %10, %c0_i32_9 : i32
    scf.if %11 {
      %c0_10 = arith.constant 0 : index
      %c0_11 = arith.constant 0 : index
      %12 = vector.load %arg7[%c0_10, %c0_11] : memref<16x128xf32, #tpu.memory_space<vmem>>, vector<16x128xf32>
      %c0_12 = arith.constant 0 : index
      %c0_13 = arith.constant 0 : index
      %13 = vector.load %arg6[%c0_12, %c0_13] : memref<16x128xf32, #tpu.memory_space<vmem>>, vector<16x128xf32>
      tpu.vector_store %arg6[%c0_12, %c0_13], %12 {strides = array<i32>} : memref<16x128xf32, #tpu.memory_space<vmem>>, vector<16x128xf32>,
    } else {
    }
    return
  }
  func.func @transform_0(%arg0: i32, %arg1: i32, %arg2: i32) -> (i32, i32) {
    %c0_i32 = arith.constant 0 : i32
    return %arg0, %arg2 : i32, i32
  }
  func.func @transform_1(%arg0: i32, %arg1: i32, %arg2: i32) -> (i32, i32) {
    %c0_i32 = arith.constant 0 : i32
    return %arg2, %arg1 : i32, i32
  }
  func.func @transform_2(%arg0: i32, %arg1: i32, %arg2: i32) -> (i32, i32) {
    %c0_i32 = arith.constant 0 : i32
    %c0_i32_0 = arith.constant 0 : i32
    return %c0_i32, %arg1 : i32, i32
  }
  func.func @transform_3(%arg0: i32, %arg1: i32, %arg2: i32) -> (i32, i32) {
    %c0_i32 = arith.constant 0 : i32
    return %arg0, %arg1 : i32, i32
  }
}

</mosaic_0001>

<llo_original>
// kernel: linear_forward.1
$region0: #{linear_forward.1}
  #allocation0 [shape = 'u32[]', space=smem, size = 0x4, offset = 0x4, fixed_abs, tag = 'smem constant byte address 0x4 - core index']
  #allocation1 [shape = 'u32[144,128]{1,0:T(1,128)}', space=vmem, size = 0x12000, scoped, tag = 'internal scratch']
  #allocation2 [shape = 'f32[16,128]{1,0:T(8,128)}', space=vmem, size = 0x2000, scoped, tag = 'scratch operand']
  %s0 = inlined_call_operand.vmem [shape: bf16[16,128], index: 0, kind: input, shape index: {}]
  %s1 = inlined_call_operand.hbm [shape: bf16[128,128], index: 1, kind: input, shape index: {}]
  %s2 = inlined_call_operand.vmem [shape: f32[1,128], index: 2, kind: input, shape index: {}]
  %s3 = inlined_call_operand.vmem [shape: f32[16,128], index: 3, kind: output, shape index: {}]
  %s4 = sld [smem:[#allocation0]]
  $region34: #{linear_forward.1} parent=0
    _
  %s6 = ssub.s32 1, %s4
  %s7 = scalar_select 0, %s6, %s4
  $region1: #{linear_forward.1} parent=0
    #allocation3 [shape = 'u8[32768]{0}', space=vmem, size = 0x8000, scoped, tag = 'input window, operand 1, single buffered']
    #allocation4 [shape = 's32[1]{0}', space=sflag, size = 0x4, scoped, tag = 'scoped memory for linear_forward.1']
    %8 = vsyncpa [#allocation4], 0
    // Predicated region
    $region2: #{linear_forward.1} parent=1 // pred_check
      _
    $region3: #{linear_forward.1} parent=1 // pred_check_branch
      %10 = sbr.rel (0) target = $region5
    $region4: #{linear_forward.1} parent=1 // pred_region
      _
    $region5: #{linear_forward.1} parent=1 // pred_fallthru
      _
    // Predicated region
    $region6: #{linear_forward.1} parent=1 // pred_check
      _
    $region7: #{linear_forward.1} parent=1 // pred_check_branch
      %12 = sbr.rel (0) target = $region9
    $region8: #{linear_forward.1} parent=1 // pred_region
      %s14 = ssub.s32 1024, 1024
      %15 = vsyncadd [#allocation4], %s14
      %s16 = sshll.u32 [#allocation3], 4
      %s17 = int_to_ptr.vmem [resolvable:$true] %s16
      %22 = dma.hbm_to_vmem [thread:$0]  %s1, 1024, %s17, [#allocation4], 64, 64, 4
    $region9: #{linear_forward.1} parent=1 // pred_fallthru
      _
    // Predicated region
    $region10: #{linear_forward.1} parent=1 // pred_check
      _
    $region11: #{linear_forward.1} parent=1 // pred_check_branch
      %24 = sbr.rel (0) target = $region13
    $region12: #{linear_forward.1} parent=1 // pred_region
      _
    $region13: #{linear_forward.1} parent=1 // pred_fallthru
      _
    // Predicated region
    $region14: #{linear_forward.1} parent=1 // pred_check
      _
    $region15: #{linear_forward.1} parent=1 // pred_check_branch
      %26 = sbr.rel (0) target = $region17
    $region16: #{linear_forward.1} parent=1 // pred_region
      %27 = dma.done [#allocation4], 1024
    $region17: #{linear_forward.1} parent=1 // pred_fallthru
      _
    %p29 = scmp.eq.s32.totalorder 0, 0
    // Predicated region
    $region18: #{linear_forward.1} parent=1 // pred_check
      %p30 = pneg %p29
    $region19: #{linear_forward.1} parent=1 // pred_check_branch
      %32 = sbr.rel (%p30) target = $region21
    $region20: #{linear_forward.1} parent=1 // pred_region
      %v33 = vld [vmem:[%s2] sm:$0x1]
      %v35 = vlaneseq
      %v36 = vshrl.u32 %v35, 7
      %v37 = vsub.s32 0, %v36
      %v38 = vrot.slane %v33, %v37
      %40 = vst [vmem:[#allocation2] sm:$0xff] %v38
      %41 = vst [vmem:[#allocation2 + $0x8] sm:$0xff] %v38
    $region21: #{linear_forward.1} parent=1 // pred_fallthru
      _
    %v42 = vld [vmem:[#allocation2] sm:$0xff]
    %v43 = vld [vmem:[#allocation2 + $0x8] sm:$0xff]
    %v44 = vld [vmem:[%s0] sm:$0xf]
    %v45 = vld [vmem:[%s0 + $0x4] sm:$0xf]
    %v46 = vld [vmem:[#allocation3] sm:$0xf]
    %v47 = vld [vmem:[#allocation3 + $0x4] sm:$0xf]
    %v48 = vld [vmem:[#allocation3 + $0x8] sm:$0xf]
    %v49 = vld [vmem:[#allocation3 + $0xc] sm:$0xf]
    %v50 = vld [vmem:[#allocation3 + $0x10] sm:$0xf]
    %v51 = vld [vmem:[#allocation3 + $0x14] sm:$0xf]
    %v52 = vld [vmem:[#allocation3 + $0x18] sm:$0xf]
    %v53 = vld [vmem:[#allocation3 + $0x1c] sm:$0xf]
    %v54 = vld [vmem:[#allocation3 + $0x20] sm:$0xf]
    %v55 = vld [vmem:[#allocation3 + $0x24] sm:$0xf]
    %v56 = vld [vmem:[#allocation3 + $0x28] sm:$0xf]
    %v57 = vld [vmem:[#allocation3 + $0x2c] sm:$0xf]
    %v58 = vld [vmem:[#allocation3 + $0x30] sm:$0xf]
    %v59 = vld [vmem:[#allocation3 + $0x34] sm:$0xf]
    %v60 = vld [vmem:[#allocation3 + $0x38] sm:$0xf]
    %v61 = vld [vmem:[#allocation3 + $0x3c] sm:$0xf]
    %v64 = vunpack.c.l.b16 %v44
    %v65 = vunpack.c.l.b16 %v45
    %v66 = vpack.c.b16 %v65, %v64
    %v84 = vunpack.c.l.b16 %v46
    %v85 = vunpack.c.l.b16 %v47
    %v86 = vunpack.c.l.b16 %v48
    %v87 = vunpack.c.l.b16 %v49
    %v88 = vunpack.c.l.b16 %v50
    %v89 = vunpack.c.l.b16 %v51
    %v90 = vunpack.c.l.b16 %v52
    %v91 = vunpack.c.l.b16 %v53
    %v92 = vunpack.c.l.b16 %v54
    %v93 = vunpack.c.l.b16 %v55
    %v94 = vunpack.c.l.b16 %v56
    %v95 = vunpack.c.l.b16 %v57
    %v96 = vunpack.c.l.b16 %v58
    %v97 = vunpack.c.l.b16 %v59
    %v98 = vunpack.c.l.b16 %v60
    %v99 = vunpack.c.l.b16 %v61
    %v100 = vpack.c.b16 %v85, %v84
    %v101 = vpack.c.b16 %v87, %v86
    %v102 = vpack.c.b16 %v89, %v88
    %v103 = vpack.c.b16 %v91, %v90
    %v104 = vpack.c.b16 %v93, %v92
    %v105 = vpack.c.b16 %v95, %v94
    %v106 = vpack.c.b16 %v97, %v96
    %v107 = vpack.c.b16 %v99, %v98
    %116 = vmatprep.subr.bf16.mxu0 0
    %117 = vmatpush1.bf16.msra.mxu0 %v100
    %118 = vmatprep.subr.bf16.mxu0 0
    %119 = vmatpush1.bf16.msra.mxu0 %v101
    %120 = vmatprep.subr.bf16.mxu0 0
    %121 = vmatpush1.bf16.msra.mxu0 %v102
    %122 = vmatprep.subr.bf16.mxu0 0
    %123 = vmatpush1.bf16.msra.mxu0 %v103
    %124 = vmatprep.subr.bf16.mxu0 0
    %125 = vmatpush1.bf16.msra.mxu0 %v104
    %126 = vmatprep.subr.bf16.mxu0 0
    %127 = vmatpush1.bf16.msra.mxu0 %v105
    %128 = vmatprep.subr.bf16.mxu0 0
    %129 = vmatpush1.bf16.msra.mxu0 %v106
    %130 = vmatprep.subr.bf16.mxu0 0
    %131 = vmatpush1.bf16.msra.mxu0 %v107
    %132 = vmatprep.subr.bf16.mxu0 0
    %133 = vmatpush1.bf16.msra.mxu0 0
    %134 = vmatprep.subr.bf16.mxu0 0
    %135 = vmatpush1.bf16.msra.mxu0 0
    %136 = vmatprep.subr.bf16.mxu0 0
    %137 = vmatpush1.bf16.msra.mxu0 0
    %138 = vmatprep.subr.bf16.mxu0 0
    %139 = vmatpush1.bf16.msra.mxu0 0
    %140 = vmatprep.subr.bf16.mxu0 0
    %141 = vmatpush1.bf16.msra.mxu0 0
    %142 = vmatprep.subr.bf16.mxu0 0
    %143 = vmatpush1.bf16.msra.mxu0 0
    %144 = vmatprep.subr.bf16.mxu0 0
    %145 = vmatpush1.bf16.msra.mxu0 0
    %146 = vmatprep.subr.bf16.mxu0 0
    %147 = vmatpush1.bf16.msra.mxu0 0
    %148 = vmatprep.mubr.bf16.mxu0 0
    %149 = vmatmul.mubr.bf16.gmra.mrb[0].mxu0 %v66
    %v150 = vpop.f32.mrb[0].mxu0
    %v151 = vadd.f32 0.0, %v150
    %v152 = vpop.f32.mrb[0].mxu0
    %v153 = vpop.f32.mrb[0].mxu0
    %v154 = vadd.f32 0.0, %v153
    %v155 = vpop.f32.mrb[0].mxu0
    %156 = vdwg.mxu0
    %v157 = vadd.f32 %v42, %v151
    %v158 = vadd.f32 %v43, %v154
    %159 = vst [vmem:[#allocation2] sm:$0xff] %v157
    %160 = vst [vmem:[#allocation2 + $0x8] sm:$0xff] %v158
    // Predicated region
    $region22: #{linear_forward.1} parent=1 // pred_check
      %p161 = pneg %p29
    $region23: #{linear_forward.1} parent=1 // pred_check_branch
      %163 = sbr.rel (%p161) target = $region25
    $region24: #{linear_forward.1} parent=1 // pred_region
      %v164 = vld [vmem:[#allocation2] sm:$0xff]
      %v165 = vld [vmem:[#allocation2 + $0x8] sm:$0xff]
      %166 = vst [vmem:[%s3] sm:$0xff] %v164
      %167 = vst [vmem:[%s3 + $0x8] sm:$0xff] %v165
    $region25: #{linear_forward.1} parent=1 // pred_fallthru
      _
    // Predicated region
    $region26: #{linear_forward.1} parent=1 // pred_check
      _
    $region27: #{linear_forward.1} parent=1 // pred_check_branch
      %169 = sbr.rel (0) target = $region29
    $region28: #{linear_forward.1} parent=1 // pred_region
      _
    $region29: #{linear_forward.1} parent=1 // pred_fallthru
      _
    // Predicated region
    $region30: #{linear_forward.1} parent=1 // pred_check
      _
    $region31: #{linear_forward.1} parent=1 // pred_check_branch
      %171 = sbr.rel (0) target = $region33
    $region32: #{linear_forward.1} parent=1 // pred_region
      _
    $region33: #{linear_forward.1} parent=1 // pred_fallthru
      _
    %172 = vsyncpa [#allocation4], 1

</llo_original>
